<compile_context>
chip_gen: v6e
topology: v6e:2x2x1
jax: 0.10.0
libtpu: 0.0.40
codegen_flags: <defaults>
</compile_context>

<pallas_src>
import functools

import jax
import jax.numpy as jnp
from jax.experimental import pallas as pl
from jax.experimental.pallas import tpu as pltpu

EPS = 1e-5  # gLN epsilon


def _prelu(v, a):
    # a is a scalar (nn.PReLU() default: single shared parameter)
    return jnp.where(v >= 0, v, a * v)


def _accumulate_stats(st_ref, v):
    # st_ref block: (1, 2, 128) f32; row 0 = running sum, row 1 = running sum of squares
    # (value replicated across the 128 lanes so no masked scalar stores are needed).
    s = jnp.sum(v)
    ss = jnp.sum(v * v)
    part = jnp.concatenate(
        [jnp.broadcast_to(s, (1, 1, 128)), jnp.broadcast_to(ss, (1, 1, 128))], axis=1
    ).astype(jnp.float32)
    st_ref[...] += part


def _mean_rstd(st_ref, n_elem):
    inv_n = 1.0 / n_elem
    mean = st_ref[0, 0:1, 0:1] * inv_n           # (1, 1)
    msq = st_ref[0, 1:2, 0:1] * inv_n
    var = jnp.maximum(msq - mean * mean, 0.0)    # clamp: single-pass form can cancel slightly < 0
    return mean, jax.lax.rsqrt(var + EPS)


# ------------------------- pass 1: conv1x1 + PReLU_1 + gLN_1 stats -------------------------
def _pass1_kernel(x_ref, w1_ref, pc_ref, a_ref, c1_ref, st1_ref, *, mxu_dtype):
    t = pl.program_id(1)

    @pl.when(t == 0)
    def _():
        st1_ref[...] = jnp.zeros_like(st1_ref)

    # 1x1 conv == channel matmul; bf16 (or f32) operands, f32 accumulation on the MXU.
    c = jnp.dot(w1_ref[...], x_ref[0].astype(mxu_dtype),
                preferred_element_type=jnp.float32)
    c = c + pc_ref[:, 0:1]                       # b1
    c = _prelu(c, a_ref[0])                      # PReLU_1 (scalar from SMEM)

    _accumulate_stats(st1_ref, c)                # gLN_1 sum / sumsq
    c1_ref[0] = c.astype(c1_ref.dtype)


# --------- pass 2: gLN_1 normalize + depthwise conv (halo) + PReLU_2 + gLN_2 stats ---------
def _pass2_kernel(cm_ref, cl_ref, cr_ref, st1_ref, pc_ref, a_ref, c2_ref, st2_ref,
                  *, kernel_size, dilation, pad, n_elem):
    t = pl.program_id(1)
    n_t = pl.num_programs(1)

    @pl.when(t == 0)
    def _():
        st2_ref[...] = jnp.zeros_like(st2_ref)

    mean1, rstd1 = _mean_rstd(st1_ref, n_elem)
    g1 = pc_ref[:, 1:2]
    be1 = pc_ref[:, 2:3]

    def norm1(v):
        return g1 * (v - mean1) * rstd1 + be1

    cur = norm1(cm_ref[0])                       # (Cout, tt)
    tt = cur.shape[-1]
    if pad > 0:
        # Halo columns come from the neighbouring tiles; at the sequence boundaries the
        # (normalized) signal is zero-padded, exactly like nn.Conv1d(padding=pad).
        left = norm1(cl_ref[0, :, tt - pad:])    # last `pad` cols of previous tile
        right = norm1(cr_ref[0, :, :pad])        # first `pad` cols of next tile
        left = jnp.where(t == 0, jnp.zeros_like(left), left)
        right = jnp.where(t == n_t - 1, jnp.zeros_like(right), right)
        win = jnp.concatenate([left, cur, right], axis=-1)   # (Cout, tt + 2*pad)
    else:
        win = cur

    # Depthwise conv: K static slices of the padded window — plain vector loads,
    # no roll / iota / per-tap masks.
    acc = pc_ref[:, 6:7] * win[:, 0:tt]
    for k in range(1, kernel_size):
        off = k * dilation
        acc = acc + pc_ref[:, 6 + k:7 + k] * win[:, off:off + tt]
    c = acc + pc_ref[:, 3:4]                     # bd
    c = _prelu(c, a_ref[1])                      # PReLU_2

    _accumulate_stats(st2_ref, c)                # gLN_2 sum / sumsq
    c2_ref[0] = c.astype(c2_ref.dtype)


# -------------- pass 3: gLN_2 normalize + fused Sc/Output 1x1 convs + residual --------------
def _pass3_kernel(c2_ref, st2_ref, x_ref, pc_ref, wso_ref, bso_ref, sc_ref, res_ref,
                  *, n_elem, n_in, mxu_dtype):
    mean2, rstd2 = _mean_rstd(st2_ref, n_elem)
    c = pc_ref[:, 4:5] * (c2_ref[0] - mean2) * rstd2 + pc_ref[:, 5:6]   # gLN_2

    # Fused Sc_conv / Output: one (2*Cin, Cout) @ (Cout, tt) MXU pass instead of two.
    y = jnp.dot(wso_ref[...], c.astype(mxu_dtype),
                preferred_element_type=jnp.float32) + bso_ref[...]
    sc_ref[0] = y[:n_in].astype(sc_ref.dtype)
    res_ref[0] = (y[n_in:] + x_ref[0]).astype(res_ref.dtype)


def conv1d_block(x, p, *, kernel_size, dilation, tile_t=128,
                 mxu_dtype=jnp.bfloat16, vmem_limit_bytes=48 * 1024 * 1024):
    """x: (B, Cin, T) float32 -> (Sc, residual), each (B, Cin, T) float32."""
    B, Cin, T = x.shape
    Cout = p["w1"].shape[0]
    K = kernel_size
    pad = dilation * (K - 1) // 2                # non-causal ("same") padding
    # TODO(synk): causal=True variant (left-only padding + trailing trim) not implemented.

    tt = T if T <= tile_t else tile_t            # time tile (keep a multiple of 128 when possible)
    assert T % tt == 0, "T must be a multiple of the time tile"  # TODO(synk): remainder tiles
    assert pad <= tt, "dilation halo must fit in one neighbouring tile; raise tile_t"
    nT = T // tt
    n_elem = float(Cout * T)                     # gLN reduction size per sample

    # ---- host-side parameter packing: one (Cout, 6+K) slab instead of ~9 lane-padded vectors ----
    # columns: 0=b1 1=g1 2=be1 3=bd 4=g2 5=be2 6..6+K-1 = depthwise weights
    pc = jnp.concatenate([p["b1"], p["g1"], p["be1"], p["bd"], p["g2"], p["be2"], p["wd"]],
                         axis=1).astype(jnp.float32)
    a12 = jnp.concatenate([p["a1"].reshape(1), p["a2"].reshape(1)]).astype(jnp.float32)  # -> SMEM
    w1 = p["w1"].astype(mxu_dtype)                                        # (Cout, Cin)
    wso = jnp.concatenate([p["wsc"], p["wout"]], axis=0).astype(mxu_dtype)  # (2*Cin, Cout)
    bso = jnp.concatenate([p["bsc"], p["bout"]], axis=0).astype(jnp.float32)  # (2*Cin, 1)

    smem_spec = pl.BlockSpec(memory_space=pltpu.MemorySpace.SMEM)

    def tile_spec(c):
        return pl.BlockSpec((1, c, tt), lambda b, t: (b, 0, t))

    def const_spec(shape):
        n = len(shape)
        return pl.BlockSpec(shape, lambda b, t, _n=n: (0,) * _n)

    stats_spec = pl.BlockSpec((1, 2, 128), lambda b, t: (b, 0, 0))
    stats_shape = jax.ShapeDtypeStruct((B, 2, 128), jnp.float32)
    cparams_acc = pltpu.CompilerParams(dimension_semantics=("parallel", "arbitrary"),
                                       vmem_limit_bytes=vmem_limit_bytes)
    cparams_par = pltpu.CompilerParams(dimension_semantics=("parallel", "parallel"),
                                       vmem_limit_bytes=vmem_limit_bytes)

    # ---- pass 1: conv1x1 + PReLU_1, gLN_1 stats ----
    c1, st1 = pl.pallas_call(
        functools.partial(_pass1_kernel, mxu_dtype=mxu_dtype),
        grid=(B, nT),
        in_specs=[tile_spec(Cin), const_spec((Cout, Cin)), const_spec((Cout, 6 + K)), smem_spec],
        out_specs=(tile_spec(Cout), stats_spec),
        out_shape=(jax.ShapeDtypeStruct((B, Cout, T), jnp.float32), stats_shape),
        compiler_params=cparams_acc,
    )(x, w1, pc, a12)

    # ---- pass 2: gLN_1 normalize + dwconv + PReLU_2, gLN_2 stats ----
    c2, st2 = pl.pallas_call(
        functools.partial(_pass2_kernel, kernel_size=K, dilation=dilation, pad=pad,
                          n_elem=n_elem),
        grid=(B, nT),
        in_specs=[tile_spec(Cout),
                  pl.BlockSpec((1, Cout, tt), lambda b, t: (b, 0, jnp.maximum(t - 1, 0))),
                  pl.BlockSpec((1, Cout, tt), lambda b, t: (b, 0, jnp.minimum(t + 1, nT - 1))),
                  stats_spec, const_spec((Cout, 6 + K)), smem_spec],
        out_specs=(tile_spec(Cout), stats_spec),
        out_shape=(jax.ShapeDtypeStruct((B, Cout, T), jnp.float32), stats_shape),
        compiler_params=cparams_acc,
    )(c1, c1, c1, st1, pc, a12)

    # ---- pass 3: gLN_2 normalize + fused Sc/Output + residual ----
    sc, res = pl.pallas_call(
        functools.partial(_pass3_kernel, n_elem=n_elem, n_in=Cin, mxu_dtype=mxu_dtype),
        grid=(B, nT),
        in_specs=[tile_spec(Cout), stats_spec, tile_spec(Cin),
                  const_spec((Cout, 6 + K)), const_spec((2 * Cin, Cout)),
                  const_spec((2 * Cin, 1))],
        out_specs=(tile_spec(Cin), tile_spec(Cin)),
        out_shape=(jax.ShapeDtypeStruct((B, Cin, T), jnp.float32),
                   jax.ShapeDtypeStruct((B, Cin, T), jnp.float32)),
        compiler_params=cparams_par,
    )(c2, st2, x, pc, wso, bso)
    return sc, res


def reference_forward(x, p, *, kernel_size, dilation):
    """Pure-JAX f32 reference matching the PyTorch forward semantics."""
    pad = dilation * (kernel_size - 1) // 2
    T = x.shape[-1]

    def prelu(v, a):
        return jnp.where(v >= 0, v, a * v)

    def gln(v, g, b):
        mean = jnp.mean(v, axis=(1, 2), keepdims=True)
        var = jnp.mean((v - mean) ** 2, axis=(1, 2), keepdims=True)
        return g[None] * (v - mean) * jax.lax.rsqrt(var + EPS) + b[None]

    c = jnp.einsum("oi,bit->bot", p["w1"], x, precision="highest") + p["b1"][None]
    c = prelu(c, p["a1"][0, 0])
    c = gln(c, p["g1"], p["be1"])
    cp = jnp.pad(c, ((0, 0), (0, 0), (pad, pad)))
    dw = sum(p["wd"][None, :, k:k + 1] * cp[:, :, k * dilation:k * dilation + T]
             for k in range(kernel_size)) + p["bd"][None]
    c = prelu(dw, p["a2"][0, 0])
    c = gln(c, p["g2"], p["be2"])
    sc = jnp.einsum("oi,bit->bot", p["wsc"], c, precision="highest") + p["bsc"][None]
    out = jnp.einsum("oi,bit->bot", p["wout"], c, precision="highest") + p["bout"][None]
    return sc, out + x


if __name__ == "__main__":
    B, Cin, Cout, T, K, D = 2, 16, 32, 256, 3, 2   # small demo shapes; pad = 2, 2 time tiles

    key = jax.random.PRNGKey(0)
    keys = jax.random.split(key, 13)
    f32 = jnp.float32
    p = dict(
        w1=jax.random.normal(keys[0], (Cout, Cin), f32) * 0.25,
        b1=jax.random.normal(keys[1], (Cout, 1), f32) * 0.05,
        a1=jnp.full((1, 1), 0.25, f32),            # nn.PReLU() default init
        g1=1.0 + 0.1 * jax.random.normal(keys[2], (Cout, 1), f32),
        be1=0.1 * jax.random.normal(keys[3], (Cout, 1), f32),
        wd=jax.random.normal(keys[4], (Cout, K), f32) * 0.5,
        bd=jax.random.normal(keys[5], (Cout, 1), f32) * 0.05,
        a2=jnp.full((1, 1), 0.10, f32),
        g2=1.0 + 0.1 * jax.random.normal(keys[6], (Cout, 1), f32),
        be2=0.1 * jax.random.normal(keys[7], (Cout, 1), f32),
        wsc=jax.random.normal(keys[8], (Cin, Cout), f32) * 0.2,
        bsc=jax.random.normal(keys[9], (Cin, 1), f32) * 0.05,
        wout=jax.random.normal(keys[10], (Cin, Cout), f32) * 0.2,
        bout=jax.random.normal(keys[11], (Cin, 1), f32) * 0.05,
    )
    x = jax.random.normal(keys[12], (B, Cin, T), f32)

    sc_ref, res_ref = reference_forward(x, p, kernel_size=K, dilation=D)

    # f32 MXU path
    sc, res = conv1d_block(x, p, kernel_size=K, dilation=D, mxu_dtype=jnp.float32)
    jax.block_until_ready((sc, res))
    assert jnp.allclose(sc, sc_ref, rtol=2e-2, atol=2e-2), "f32: skip-connection mismatch"
    assert jnp.allclose(res, res_ref, rtol=2e-2, atol=2e-2), "f32: residual mismatch"

    # bf16 MXU operands + f32 accumulation (v6e / v7x fast path) — looser tolerance vs f32 reference
    sc, res = conv1d_block(x, p, kernel_size=K, dilation=D, mxu_dtype=jnp.bfloat16)
    jax.block_until_ready((sc, res))
    assert jnp.allclose(sc, sc_ref, rtol=5e-2, atol=5e-2), "bf16: skip-connection mismatch"
    assert jnp.allclose(res, res_ref, rtol=5e-2, atol=5e-2), "bf16: residual mismatch"

    print("KERNEL_OK")
</pallas_src>

<mosaic_0001>
module attributes {stable_mosaic.version = 11 : i64} {
  func.func @_pass1_kernel(%arg0: i32, %arg1: i32, %arg2: memref<1x16x128xf32, #tpu.memory_space<vmem>>, %arg3: memref<32x16xf32, #tpu.memory_space<vmem>>, %arg4: memref<32x9xf32, #tpu.memory_space<vmem>>, %arg5: memref<2xf32, #tpu.memory_space<smem>>, %arg6: memref<1x32x128xf32, #tpu.memory_space<vmem>>, %arg7: memref<1x2x128xf32, #tpu.memory_space<vmem>>) attributes {dimension_semantics = [#tpu.dimension_semantics<parallel>, #tpu.dimension_semantics<arbitrary>], iteration_bounds = array<i64: 2, 2>, scalar_prefetch = 0 : i64, scratch_operands = 0 : i64, tpu.core_type = #tpu.core_type<tc>, window_params = [{transform_indices = @transform_0, window_bounds = array<i64: 1, 16, 128>}, {pipeline_mode = #tpu.pipeline_mode<synchronous>, transform_indices = @transform_1, window_bounds = array<i64: 32, 16>}, {pipeline_mode = #tpu.pipeline_mode<synchronous>, transform_indices = @transform_2, window_bounds = array<i64: 32, 9>}, {transform_indices = @transform_3, window_bounds = array<i64: 2>}, {transform_indices = @transform_4, window_bounds = array<i64: 1, 32, 128>}, {transform_indices = @transform_5, window_bounds = array<i64: 1, 2, 128>}]} {
    %c0_i32 = arith.constant 0 : i32
    %0 = arith.cmpi eq, %arg1, %c0_i32 : i32
    %1 = arith.extui %0 : i1 to i32
    %c0_i32_0 = arith.constant 0 : i32
    %2 = arith.cmpi ne, %1, %c0_i32_0 : i32
    scf.if %2 {
      %cst_20 = arith.constant 0.000000e+00 : f32
      %34 = vector.broadcast %cst_20 : f32 to vector<1x2x128xf32>
      %c0_21 = arith.constant 0 : index
      %c0_22 = arith.constant 0 : index
      %c0_23 = arith.constant 0 : index
      %35 = vector.load %arg7[%c0_21, %c0_22, %c0_23] : memref<1x2x128xf32, #tpu.memory_space<vmem>>, vector<1x2x128xf32>
      tpu.vector_store %arg7[%c0_21, %c0_22, %c0_23], %34 {strides = array<i32>} : memref<1x2x128xf32, #tpu.memory_space<vmem>>, vector<1x2x128xf32>,
    } else {
    }
    %c0 = arith.constant 0 : index
    %c0_1 = arith.constant 0 : index
    %3 = vector.load %arg3[%c0, %c0_1] : memref<32x16xf32, #tpu.memory_space<vmem>>, vector<32x16xf32>
    %c0_2 = arith.constant 0 : index
    %c0_3 = arith.constant 0 : index
    %c0_4 = arith.constant 0 : index
    %4 = vector.load %arg2[%c0_2, %c0_3, %c0_4] : memref<1x16x128xf32, #tpu.memory_space<vmem>>, vector<1x16x128xf32>
    %5 = vector.shape_cast %4 : vector<1x16x128xf32> to vector<16x128xf32>
    %cst = arith.constant dense<0.000000e+00> : vector<32x128xf32>
    %6 = tpu.matmul %3, %5, %cst {dimension_numbers = #tpu.dot_dimension_numbers<[1], [0], [0], [1], [0, 0, 1, 1], [], []>} : vector<32x16xf32>, vector<16x128xf32>, vector<32x128xf32> -> vector<32x128xf32>
    %c0_5 = arith.constant 0 : index
    %c0_6 = arith.constant 0 : index
    %7 = vector.load %arg4[%c0_5, %c0_6] : memref<32x9xf32, #tpu.memory_space<vmem>>, vector<32x1xf32>
    %8 = vector.broadcast %7 : vector<32x1xf32> to vector<32x128xf32>
    %9 = arith.addf %6, %8 : vector<32x128xf32>
    %c0_7 = arith.constant 0 : index
    %10 = memref.load %arg5[%c0_7] : memref<2xf32, #tpu.memory_space<smem>>
    %cst_8 = arith.constant 0.000000e+00 : f32
    %11 = vector.broadcast %cst_8 : f32 to vector<32x128xf32>
    %12 = arith.cmpf oge, %9, %11 : vector<32x128xf32>
    %13 = vector.broadcast %10 : f32 to vector<32x128xf32>
    %14 = arith.mulf %13, %9 : vector<32x128xf32>
    %15 = arith.select %12, %9, %14 : vector<32x128xi1>, vector<32x128xf32>
    %16 = vector.shape_cast %15 : vector<32x128xf32> to vector<1x32x128xf32>
    %cst_9 = arith.constant dense<0.000000e+00> : vector<1xf32>
    %17 = vector.multi_reduction <add>, %16, %cst_9 [1, 2] : vector<1x32x128xf32> to vector<1xf32>
    %18 = vector.shape_cast %17 : vector<1xf32> to vector<1x1x1xf32>
    %19 = vector.extract %18[0, 0, 0] : f32 from vector<1x1x1xf32>
    %20 = arith.mulf %15, %15 : vector<32x128xf32>
    %21 = vector.shape_cast %20 : vector<32x128xf32> to vector<1x32x128xf32>
    %cst_10 = arith.constant dense<0.000000e+00> : vector<1xf32>
    %22 = vector.multi_reduction <add>, %21, %cst_10 [1, 2] : vector<1x32x128xf32> to vector<1xf32>
    %23 = vector.shape_cast %22 : vector<1xf32> to vector<1x1x1xf32>
    %24 = vector.extract %23[0, 0, 0] : f32 from vector<1x1x1xf32>
    %25 = vector.broadcast %19 : f32 to vector<1x1x128xf32>
    %26 = vector.broadcast %24 : f32 to vector<1x1x128xf32>
    %27 = tpu.concatenate %25, %26 in 1 : vector<1x1x128xf32>, vector<1x1x128xf32> -> vector<1x2x128xf32>
    %c0_11 = arith.constant 0 : index
    %c0_12 = arith.constant 0 : index
    %c0_13 = arith.constant 0 : index
    %28 = vector.load %arg7[%c0_11, %c0_12, %c0_13] : memref<1x2x128xf32, #tpu.memory_space<vmem>>, vector<1x2x128xf32>
    %29 = arith.addf %28, %27 : vector<1x2x128xf32>
    %c0_14 = arith.constant 0 : index
    %c0_15 = arith.constant 0 : index
    %c0_16 = arith.constant 0 : index
    %30 = vector.load %arg7[%c0_14, %c0_15, %c0_16] : memref<1x2x128xf32, #tpu.memory_space<vmem>>, vector<1x2x128xf32>
    tpu.vector_store %arg7[%c0_14, %c0_15, %c0_16], %29 {strides = array<i32>} : memref<1x2x128xf32, #tpu.memory_space<vmem>>, vector<1x2x128xf32>,
    %c0_17 = arith.constant 0 : index
    %c0_18 = arith.constant 0 : index
    %c0_19 = arith.constant 0 : index
    %31 = vector.load %arg6[%c0_17, %c0_18, %c0_19] : memref<1x32x128xf32, #tpu.memory_space<vmem>>, vector<1x32x128xf32>
    %32 = vector.shape_cast %31 : vector<1x32x128xf32> to vector<32x128xf32>
    %33 = vector.shape_cast %15 : vector<32x128xf32> to vector<1x32x128xf32>
    tpu.vector_store %arg6[%c0_17, %c0_18, %c0_19], %33 {strides = array<i32>} : memref<1x32x128xf32, #tpu.memory_space<vmem>>, vector<1x32x128xf32>,
    return
  }
  func.func @transform_0(%arg0: i32, %arg1: i32) -> (i32, i32, i32) {
    %c0_i32 = arith.constant 0 : i32
    %c0_i32_0 = arith.constant 0 : i32
    return %arg0, %c0_i32, %arg1 : i32, i32, i32
  }
  func.func @transform_1(%arg0: i32, %arg1: i32) -> (i32, i32) {
    %c0_i32 = arith.constant 0 : i32
    %c0_i32_0 = arith.constant 0 : i32
    %c0_i32_1 = arith.constant 0 : i32
    return %c0_i32, %c0_i32_0 : i32, i32
  }
  func.func @transform_2(%arg0: i32, %arg1: i32) -> (i32, i32) {
    %c0_i32 = arith.constant 0 : i32
    %c0_i32_0 = arith.constant 0 : i32
    %c0_i32_1 = arith.constant 0 : i32
    return %c0_i32, %c0_i32_0 : i32, i32
  }
  func.func @transform_3(%arg0: i32, %arg1: i32) -> i32 {
    %c0_i32 = arith.constant 0 : i32
    %c0_i32_0 = arith.constant 0 : i32
    return %c0_i32 : i32
  }
  func.func @transform_4(%arg0: i32, %arg1: i32) -> (i32, i32, i32) {
    %c0_i32 = arith.constant 0 : i32
    %c0_i32_0 = arith.constant 0 : i32
    return %arg0, %c0_i32, %arg1 : i32, i32, i32
  }
  func.func @transform_5(%arg0: i32, %arg1: i32) -> (i32, i32, i32) {
    %c0_i32 = arith.constant 0 : i32
    %c0_i32_0 = arith.constant 0 : i32
    %c0_i32_1 = arith.constant 0 : i32
    return %arg0, %c0_i32, %c0_i32_0 : i32, i32, i32
  }
}

</mosaic_0001>

<llo_original>
// kernel: tpu_custom_call.1
$region0: #{tpu_custom_call.1}
  #allocation0 [shape = 'u32[]', space=smem, size = 0x4, offset = 0x4, fixed_abs, tag = 'smem constant byte address 0x4 - core index']
  #allocation1 [shape = 'u32[144,128]{1,0:T(1,128)}', space=vmem, size = 0x12000, scoped, tag = 'internal scratch']
  %s0 = inlined_call_operand.vmem [shape: f32[2,16,256], index: 0, kind: input, shape index: {}]
  %s1 = inlined_call_operand.vmem [shape: f32[32,16], index: 1, kind: input, shape index: {}]
  %s2 = inlined_call_operand.vmem [shape: f32[32,9], index: 2, kind: input, shape index: {}]
  %s3 = inlined_call_operand.vmem [shape: f32[2], index: 3, kind: input, shape index: {}]
  %s4 = inlined_call_operand.hbm [shape: f32[2,32,256], index: 4, kind: output, shape index: {0}]
  %s5 = inlined_call_operand.hbm [shape: f32[2,2,128], index: 5, kind: output, shape index: {1}]
  %6 = xla_tuple %s4, %s5
  %s7 = sld [smem:[#allocation0]]
  $region103: #{tpu_custom_call.1} parent=0
    _
  %s9 = ssub.s32 1, %s7
  %s10 = scalar_select 0, %s9, %s7
  $region1: #{tpu_custom_call.1} parent=0
    #allocation2 [shape = 'u8[16384]{0}', space=vmem, size = 0x4000, scoped, tag = 'input window, operand 0']
    #allocation3 [shape = 'u8[512]{0}', space=smem, size = 0x200, scoped, tag = 'input window, operand 3, single buffered']
    #allocation4 [shape = 's32[2]{0}', space=sflag, size = 0x8, scoped, tag = 'scoped memory for tpu_custom_call.1']
    #allocation5 [shape = 's32[2]{0}', space=sflag, size = 0x8, scoped, tag = 'scoped memory for tpu_custom_call.1']
    #allocation6 [shape = 'u8[32768]{0}', space=vmem, size = 0x8000, scoped, tag = 'output window, operand 0']
    #allocation7 [shape = 'u8[2048]{0}', space=vmem, size = 0x800, scoped, tag = 'output window, operand 1']
    #allocation8 [shape = 's32[2]{0}', space=sflag, size = 0x8, scoped, tag = 'scoped memory for tpu_custom_call.1']
    %11 = vsyncpa [#allocation5], 0
    %12 = vsyncpa [#allocation4], 0
    %s13 = scalar_lea.sflag [#allocation4], 1
    %14 = vsyncpa %s13, 0
    %15 = vsyncpa [#allocation8], 0
    %s16 = scalar_lea.sflag [#allocation8], 1
    %17 = vsyncpa %s16, 0
    loop: start=0, step=1, limit=6
    $region2: #{tpu_custom_call.1} parent=1 // loop_pre_header
      _
    $region3: #{tpu_custom_call.1} parent=1 // loop_header
      %s19 = sphi 0, %s23
      %p20 = scmp.ge.s32.totalorder %s19, 6
      %s26 = sphi 0, %s38
      %s27 = sphi 0, %s34
      %s28 = sphi 0, %s26
      %s29 = sphi 0, %s27
      %s30 = sphi 0, %s28
      %s31 = sphi 0, %s29
      %s43 = sphi 0, %s45
      %s46 = sphi 0, %s43
      %s47 = sphi 0, %s46
      %s63 = sphi 0, %s47
      %s67 = sphi 0, %s67
      %s69 = sphi 0, %s67
      %s70 = sphi 0, %s69
      %s84 = sphi 0, %s70
      %s88 = sphi 0, %s88
      %s90 = sphi 0, %s88
      %s91 = sphi 0, %s90
      %s105 = sphi 0, %s91
      %s109 = sphi 0, %s109
      %s111 = sphi 0, %s109
      %s112 = sphi 0, %s111
      %s126 = sphi 0, %s112
      %s134 = sphi 0, %s136
      %s137 = sphi 0, %s134
      %s138 = sphi 0, %s137
      %s154 = sphi 0, %s138
      %s160 = sphi 0, %s162
      %s163 = sphi 0, %s160
      %s164 = sphi 0, %s163
      %s180 = sphi 0, %s164
    $region4: #{tpu_custom_call.1} parent=1 // loop_header_branch
      %22 = sbr.rel (%p20) target = $region8
    $region5: #{tpu_custom_call.1} parent=1 // loop_body
      %s24 = ssub.s32 %s19, 1
      %s25 = ssub.s32 %s19, 2
      %s32 = sadd.s32 1, %s27
      %p33 = scmp.ge.s32.totalorder %s32, 2
      %s34 = scalar_select %p33, 0, %s32
      %s35 = sadd.s32 1, %s26
      %s36 = scalar_select %p33, %s35, %s26
      %p37 = scmp.ge.s32.totalorder %s36, 2
      %s38 = scalar_select %p37, 0, %s36
      %s39 = ssub.s32 %s26, %s38
      %s40 = ssub.s32 %s27, %s34
      %s41 = sor.u32 %s39, %s40
      %p42 = scmp.eq.s32.totalorder %s41, 0
      %s44 = sadd.s32 %s43, 1
      %s45 = scalar_select %p42, %s43, %s44
      %p48 = pneg %p42
      %p49 = scmp.eq.s32.totalorder %s19, 3
      %p50 = por %p48, %p49
      %p51 = scmp.ne.s32.totalorder %s43, %s46
      %p52 = scmp.eq.s32.totalorder %s19, 0
      %p53 = por %p51, %p52
      %p54 = scmp.ne.s32.totalorder %s43, %s46
      %p55 = scmp.eq.s32.totalorder %s24, 3
      %p56 = por %p54, %p55
      %p57 = scmp.ne.s32.totalorder %s46, %s47
      %p58 = scmp.eq.s32.totalorder %s24, 0
      %p59 = por %p57, %p58
      %p60 = scmp.ne.s32.totalorder %s46, %s47
      %p61 = scmp.eq.s32.totalorder %s25, 3
      %p62 = por %p60, %p61
      %p64 = scmp.ne.s32.totalorder %s47, %s63
      %p65 = scmp.eq.s32.totalorder %s25, 0
      %p66 = por %p64, %p65
      %s68 = sadd.s32 %s67, 1
      %p71 = scmp.eq.s32.totalorder %s19, 3
      %p72 = scmp.ne.s32.totalorder %s67, %s69
      %p73 = scmp.eq.s32.totalorder %s19, 0
      %p74 = por %p72, %p73
      %p75 = scmp.ne.s32.totalorder %s67, %s69
      %p76 = scmp.eq.s32.totalorder %s24, 3
      %p77 = por %p75, %p76
      %p78 = scmp.ne.s32.totalorder %s69, %s70
      %p79 = scmp.eq.s32.totalorder %s24, 0
      %p80 = por %p78, %p79
      %p81 = scmp.ne.s32.totalorder %s69, %s70
      %p82 = scmp.eq.s32.totalorder %s25, 3
      %p83 = por %p81, %p82
      %p85 = scmp.ne.s32.totalorder %s70, %s84
      %p86 = scmp.eq.s32.totalorder %s25, 0
      %p87 = por %p85, %p86
      %s89 = sadd.s32 %s88, 1
      %p92 = scmp.eq.s32.totalorder %s19, 3
      %p93 = scmp.ne.s32.totalorder %s88, %s90
      %p94 = scmp.eq.s32.totalorder %s19, 0
      %p95 = por %p93, %p94
      %p96 = scmp.ne.s32.totalorder %s88, %s90
      %p97 = scmp.eq.s32.totalorder %s24, 3
      %p98 = por %p96, %p97
      %p99 = scmp.ne.s32.totalorder %s90, %s91
      %p100 = scmp.eq.s32.totalorder %s24, 0
      %p101 = por %p99, %p100
      %p102 = scmp.ne.s32.totalorder %s90, %s91
      %p103 = scmp.eq.s32.totalorder %s25, 3
      %p104 = por %p102, %p103
      %p106 = scmp.ne.s32.totalorder %s91, %s105
      %p107 = scmp.eq.s32.totalorder %s25, 0
      %p108 = por %p106, %p107
      %s110 = sadd.s32 %s109, 1
      %p113 = scmp.eq.s32.totalorder %s19, 3
      %p114 = scmp.ne.s32.totalorder %s109, %s111
      %p115 = scmp.eq.s32.totalorder %s19, 0
      %p116 = por %p114, %p115
      %p117 = scmp.ne.s32.totalorder %s109, %s111
      %p118 = scmp.eq.s32.totalorder %s24, 3
      %p119 = por %p117, %p118
      %p120 = scmp.ne.s32.totalorder %s111, %s112
      %p121 = scmp.eq.s32.totalorder %s24, 0
      %p122 = por %p120, %p121
      %p123 = scmp.ne.s32.totalorder %s111, %s112
      %p124 = scmp.eq.s32.totalorder %s25, 3
      %p125 = por %p123, %p124
      %p127 = scmp.ne.s32.totalorder %s112, %s126
      %p128 = scmp.eq.s32.totalorder %s25, 0
      %p129 = por %p127, %p128
      %s130 = ssub.s32 %s26, %s38
      %s131 = ssub.s32 %s27, %s34
      %s132 = sor.u32 %s130, %s131
      %p133 = scmp.eq.s32.totalorder %s132, 0
      %s135 = sadd.s32 %s134, 1
      %s136 = scalar_select %p133, %s134, %s135
      %p139 = pneg %p133
      %p140 = scmp.eq.s32.totalorder %s19, 3
      %p141 = por %p139, %p140
      %p142 = scmp.ne.s32.totalorder %s134, %s137
      %p143 = scmp.eq.s32.totalorder %s19, 0
      %p144 = por %p142, %p143
      %p145 = scmp.ne.s32.totalorder %s134, %s137
      %p146 = scmp.eq.s32.totalorder %s24, 3
      %p147 = por %p145, %p146
      %p148 = scmp.ne.s32.totalorder %s137, %s138
      %p149 = scmp.eq.s32.totalorder %s24, 0
      %p150 = por %p148, %p149
      %p151 = scmp.ne.s32.totalorder %s137, %s138
      %p152 = scmp.eq.s32.totalorder %s25, 3
      %p153 = por %p151, %p152
      %p155 = scmp.ne.s32.totalorder %s138, %s154
      %p156 = scmp.eq.s32.totalorder %s25, 0
      %p157 = por %p155, %p156
      %s158 = ssub.s32 %s26, %s38
      %p159 = scmp.eq.s32.totalorder %s158, 0
      %s161 = sadd.s32 %s160, 1
      %s162 = scalar_select %p159, %s160, %s161
      %p165 = pneg %p159
      %p166 = scmp.eq.s32.totalorder %s19, 3
      %p167 = por %p165, %p166
      %p168 = scmp.ne.s32.totalorder %s160, %s163
      %p169 = scmp.eq.s32.totalorder %s19, 0
      %p170 = por %p168, %p169
      %p171 = scmp.ne.s32.totalorder %s160, %s163
      %p172 = scmp.eq.s32.totalorder %s24, 3
      %p173 = por %p171, %p172
      %p174 = scmp.ne.s32.totalorder %s163, %s164
      %p175 = scmp.eq.s32.totalorder %s24, 0
      %p176 = por %p174, %p175
      %p177 = scmp.ne.s32.totalorder %s163, %s164
      %p178 = scmp.eq.s32.totalorder %s25, 3
      %p179 = por %p177, %p178
      %p181 = scmp.ne.s32.totalorder %s164, %s180
      %p182 = scmp.eq.s32.totalorder %s25, 0
      %p183 = por %p181, %p182
      %p184 = scmp.le.s32.totalorder 1, %s19
      %p185 = scmp.lt.s32.totalorder %s19, 5
      %p186 = pnand %p184, %p185
      %p187 = pneg %p186
      // Predicated region
      $region9: #{tpu_custom_call.1} parent=5 // pred_check
        _
      $region10: #{tpu_custom_call.1} parent=5 // pred_check_branch
        %189 = sbr.rel (%p186) target = $region12
      $region11: #{tpu_custom_call.1} parent=5 // pred_region
        %s190 = ssub.s32 %s19, 1
        // Predicated region
        $region13: #{tpu_custom_call.1} parent=11 // pred_check
          %p191 = pneg %p80
        $region14: #{tpu_custom_call.1} parent=11 // pred_check_branch
          %193 = sbr.rel (%p191) target = $region16
        $region15: #{tpu_custom_call.1} parent=11 // pred_region
          _
        $region16: #{tpu_custom_call.1} parent=11 // pred_fallthru
          _
        // Predicated region
        $region17: #{tpu_custom_call.1} parent=11 // pred_check
          %p194 = pneg %p101
        $region18: #{tpu_custom_call.1} parent=11 // pred_check_branch
          %196 = sbr.rel (%p194) target = $region20
        $region19: #{tpu_custom_call.1} parent=11 // pred_region
          _
        $region20: #{tpu_custom_call.1} parent=11 // pred_fallthru
          _
        // Predicated region
        $region21: #{tpu_custom_call.1} parent=11 // pred_check
          %p197 = pneg %p122
        $region22: #{tpu_custom_call.1} parent=11 // pred_check_branch
          %199 = sbr.rel (%p197) target = $region24
        $region23: #{tpu_custom_call.1} parent=11 // pred_region
          %s201 = ssub.s32 16, 16
          %202 = vsyncadd [#allocation5], %s201
          %s204 = sshll.u32 %s3, 4
          %s205 = int_to_ptr.vmem [resolvable:$true] %s204
          %207 = dma.vmem_to_smem %s205, 16, [#allocation3], [#allocation5]
        $region24: #{tpu_custom_call.1} parent=11 // pred_fallthru
          _
      $region12: #{tpu_custom_call.1} parent=5 // pred_fallthru
        _
      %p208 = scmp.lt.s32.totalorder %s19, 4
      // Predicated region
      $region25: #{tpu_custom_call.1} parent=5 // pred_check
        %p209 = pneg %p208
      $region26: #{tpu_custom_call.1} parent=5 // pred_check_branch
        %211 = sbr.rel (%p209) target = $region28
      $region27: #{tpu_custom_call.1} parent=5 // pred_region
        // Predicated region
        $region29: #{tpu_custom_call.1} parent=27 // pred_check
          %p212 = pneg %p53
        $region30: #{tpu_custom_call.1} parent=27 // pred_check_branch
          %214 = sbr.rel (%p212) target = $region32
        $region31: #{tpu_custom_call.1} parent=27 // pred_region
          %s215 = sand.u32 %s43, 1
          %s216 = sand.u32 %s43, 1
          %s217 = smul.addr %s216, 16
          %s218 = scalar_lea.vmem [#allocation2], %s217
          %s219 = smul.addr %s26, 4
          %s220 = sadd.s32 %s27, %s219
          %s221 = smul.addr %s220, 8
          %s222 = scalar_lea.vmem %s0, %s221
          // Predicated region
          $region33: #{tpu_custom_call.1} parent=31 // pred_check
            _
          $region34: #{tpu_custom_call.1} parent=31 // pred_check_branch
            %224 = sbr.rel (0) target = $region36
          $region35: #{tpu_custom_call.1} parent=31 // pred_region
            // Predicated region
            $region37: #{tpu_custom_call.1} parent=35 // pred_check
              _
            $region38: #{tpu_custom_call.1} parent=35 // pred_check_branch
              %226 = sbr.rel (0) target = $region40
            $region39: #{tpu_custom_call.1} parent=35 // pred_region
              // Predicated region
              $region52: #{tpu_custom_call.1} parent=39 // pred_check
                _
              $region53: #{tpu_custom_call.1} parent=39 // pred_check_branch
                %244 = sbr.rel (0) target = $region55
              $region54: #{tpu_custom_call.1} parent=39 // pred_region
                loop: start=0, step=1, limit=1
                $region56: #{tpu_custom_call.1} parent=54 // loop_pre_header
                  _
                $region57: #{tpu_custom_call.1} parent=54 // loop_header
                  %s246 = sphi 0, %s250
                  %p247 = scmp.ge.s32.totalorder %s246, 1
                  %s251 = sphi %s222, %s222
                  %s252 = sphi %s218, %s218
                $region58: #{tpu_custom_call.1} parent=54 // loop_header_branch
                  %249 = sbr.rel (%p247) target = $region62
                $region59: #{tpu_custom_call.1} parent=54 // loop_body
                  %v253 = vld [vmem:[%s251] sm:$0xff]
                  %254 = vst [vmem:[%s252] sm:$0xff] %v253
                  %v255 = vld [vmem:[%s251 + $0x10] sm:$0xff]
                  %256 = vst [vmem:[%s252 + $0x8] sm:$0xff] %v255
                $region60: #{tpu_custom_call.1} parent=54 // loop_footer
                  %s250 = sadd.s32 1, %s246
                $region61: #{tpu_custom_call.1} parent=54 // loop_footer_branch
                  %245 = sbr.rel target = $region57
                $region62: #{tpu_custom_call.1} parent=54 // loop_exit
                  _
              $region55: #{tpu_custom_call.1} parent=39 // pred_fallthru
                _
              // Predicated region
              $region63: #{tpu_custom_call.1} parent=39 // pred_check
                _
              $region64: #{tpu_custom_call.1} parent=39 // pred_check_branch
                %258 = sbr.rel target = $region66
              $region65: #{tpu_custom_call.1} parent=39 // pred_region
                _
              $region66: #{tpu_custom_call.1} parent=39 // pred_fallthru
                _
            $region40: #{tpu_custom_call.1} parent=35 // pred_fallthru
              _
            // Predicated region
            $region41: #{tpu_custom_call.1} parent=35 // pred_check
              _
            $region42: #{tpu_custom_call.1} parent=35 // pred_check_branch
              %228 = sbr.rel target = $region44
            $region43: #{tpu_custom_call.1} parent=35 // pred_region
              %s230 = ssub.s32 256, 1
              loop: start=0, step=1, limit=1
              $region45: #{tpu_custom_call.1} parent=43 // loop_pre_header
                _
              $region46: #{tpu_custom_call.1} parent=43 // loop_header
                %s232 = sphi 0, %s236
                %p233 = scmp.ge.s32.totalorder %s232, 1
                %s237 = sphi %s222, %s222
                %s238 = sphi %s218, %s218
              $region47: #{tpu_custom_call.1} parent=43 // loop_header_branch
                %235 = sbr.rel (%p233) target = $region51
              $region48: #{tpu_custom_call.1} parent=43 // loop_body
                %v239 = vld [vmem:[%s237] sm:%s230]
                %240 = vst [vmem:[%s238] sm:%s230] %v239
                %v241 = vld [vmem:[%s237 + $0x10] sm:%s230]
                %242 = vst [vmem:[%s238 + $0x8] sm:%s230] %v241
              $region49: #{tpu_custom_call.1} parent=43 // loop_footer
                %s236 = sadd.s32 1, %s232
              $region50: #{tpu_custom_call.1} parent=43 // loop_footer_branch
                %231 = sbr.rel target = $region46
              $region51: #{tpu_custom_call.1} parent=43 // loop_exit
                _
            $region44: #{tpu_custom_call.1} parent=35 // pred_fallthru
              _
          $region36: #{tpu_custom_call.1} parent=31 // pred_fallthru
            _
          %259 = vnop
        $region32: #{tpu_custom_call.1} parent=27 // pred_fallthru
          _
      $region28: #{tpu_custom_call.1} parent=5 // pred_fallthru
        _
      %p260 = scmp.le.s32.totalorder 1, %s19
      %p261 = scmp.lt.s32.totalorder %s19, 5
      %p262 = pnand %p260, %p261
      %p263 = pneg %p262
      // Predicated region
      $region67: #{tpu_custom_call.1} parent=5 // pred_check
        _
      $region68: #{tpu_custom_call.1} parent=5 // pred_check_branch
        %265 = sbr.rel (%p262) target = $region70
      $region69: #{tpu_custom_call.1} parent=5 // pred_region
        %s266 = ssub.s32 %s19, 1
        %s267 = sand.u32 %s46, 1
        %s268 = sand.u32 %s46, 1
        %s269 = smul.addr %s268, 16
        %s270 = scalar_lea.vmem [#allocation2], %s269
        // Predicated region
        $region71: #{tpu_custom_call.1} parent=69 // pred_check
          %p271 = pneg %p59
        $region72: #{tpu_custom_call.1} parent=69 // pred_check_branch
          %273 = sbr.rel (%p271) target = $region74
        $region73: #{tpu_custom_call.1} parent=69 // pred_region
          _
        $region74: #{tpu_custom_call.1} parent=69 // pred_fallthru
          _
        // Predicated region
        $region75: #{tpu_custom_call.1} parent=69 // pred_check
          %p274 = pneg %p122
        $region76: #{tpu_custom_call.1} parent=69 // pred_check_branch
          %276 = sbr.rel (%p274) target = $region78
        $region77: #{tpu_custom_call.1} parent=69 // pred_region
          %277 = dma.done [#allocation5], 16
        $region78: #{tpu_custom_call.1} parent=69 // pred_fallthru
          _
        %278 = sfence
        %s279 = sand.u32 %s46, 1
        %s280 = sand.u32 %s46, 1
        %s281 = smul.addr %s280, 16
        %s282 = scalar_lea.vmem [#allocation2], %s281
        %p283 = pneg %p59
        %p284 = pneg %p56
        %p285 = pneg %p80
        %p286 = pneg %p77
        %p287 = pneg %p101
        %p288 = pneg %p98
        %p289 = pneg %p122
        %p290 = pneg %p119
        %p291 = pneg %p150
        %p292 = pneg %p147
        %s293 = sand.u32 %s137, 1
        %s294 = scalar_lea.sflag [#allocation4], %s293
        %s295 = sand.u32 %s137, 1
        %s296 = smul.addr %s295, 32
        %s297 = scalar_lea.vmem [#allocation6], %s296
        %p298 = pneg %p176
        %p299 = pneg %p173
        %s300 = sand.u32 %s163, 1
        %s301 = scalar_lea.sflag [#allocation8], %s300
        %s302 = sand.u32 %s163, 1
        %s303 = smul.addr %s302, 2
        %s304 = scalar_lea.vmem [#allocation7], %s303
        %p305 = scmp.eq.s32.totalorder %s29, 0
        // Predicated region
        $region79: #{tpu_custom_call.1} parent=69 // pred_check
          %p306 = pneg %p305
        $region80: #{tpu_custom_call.1} parent=69 // pred_check_branch
          %308 = sbr.rel (%p306) target = $region82
        $region81: #{tpu_custom_call.1} parent=69 // pred_region
          %309 = vst [vmem:[%s304] sm:$0x3] 0.0
        $region82: #{tpu_custom_call.1} parent=69 // pred_fallthru
          _
        %v310 = vld [vmem:[%s1] sm:$0xff]
        %v311 = vld [vmem:[%s1 + $0x8] sm:$0xff]
        %v312 = vld [vmem:[%s1 + $0x10] sm:$0xff]
        %v313 = vld [vmem:[%s1 + $0x18] sm:$0xff]
        %v314 = vld [vmem:[%s270] sm:$0xff]
        %v315 = vld [vmem:[%s270 + $0x8] sm:$0xff]
        %v316 = vld [vmem:[%s2] sm:$0xff]
        %v317 = vld [vmem:[%s2 + $0x8] sm:$0xff]
        %v318 = vld [vmem:[%s2 + $0x10] sm:$0xff]
        %v319 = vld [vmem:[%s2 + $0x18] sm:$0xff]
        %321 = vset.pattern.permute.xlu0 0
        %322 = vperm.xlu0 %321, %v316
        %v323 = vpop.permute.xlu0 %322
        %326 = vset.pattern.permute.xlu0 0
        %327 = vperm.xlu0 %326, %v317
        %v328 = vpop.permute.xlu0 %327
        %331 = vset.pattern.permute.xlu0 0
        %332 = vperm.xlu0 %331, %v318
        %v333 = vpop.permute.xlu0 %332
        %336 = vset.pattern.permute.xlu0 0
        %337 = vperm.xlu0 %336, %v319
        %v338 = vpop.permute.xlu0 %337
        %vm340 = vcmask 130048
        %v342 = vsel %vm340, %v310, 0
        %v345 = vsel %vm340, %v311, 0
        %v348 = vsel %vm340, %v312, 0
        %v351 = vsel %vm340, %v313, 0
        %353 = vmatprep.subr.mxu0 0.0
        %354 = vmatpush1.msra.mxu0 0.0
        %355 = vmatprep.subr.mxu0 0.0
        %356 = vmatpush1.msra.mxu0 0.0
        %357 = vmatprep.subr.mxu0 0.0
        %358 = vmatpush1.msra.mxu0 0.0
        %359 = vmatprep.subr.mxu0 0.0
        %360 = vmatpush1.msra.mxu0 0.0
        %361 = vmatprep.subr.mxu0 0.0
        %362 = vmatpush1.msra.mxu0 0.0
        %363 = vmatprep.subr.mxu0 0.0
        %364 = vmatpush1.msra.mxu0 0.0
        %365 = vmatprep.subr.mxu0 0.0
        %366 = vmatpush1.msra.mxu0 0.0
        %367 = vmatprep.subr.mxu0 0.0
        %368 = vmatpush1.msra.mxu0 0.0
        %369 = vmatprep.subr.mxu0 0.0
        %370 = vmatpush1.msra.mxu0 0.0
        %371 = vmatprep.subr.mxu0 0.0
        %372 = vmatpush1.msra.mxu0 0.0
        %373 = vmatprep.subr.mxu0 0.0
        %374 = vmatpush1.msra.mxu0 0.0
        %375 = vmatprep.subr.mxu0 0.0
        %376 = vmatpush1.msra.mxu0 0.0
        %377 = vmatprep.subr.mxu0 0.0
        %378 = vmatpush1.msra.mxu0 0.0
        %379 = vmatprep.subr.mxu0 0.0
        %380 = vmatpush1.msra.mxu0 0.0
        %381 = vmatprep.subr.mxu0 0.0
        %382 = vmatpush1.msra.mxu0 %v315
        %383 = vmatprep.subr.mxu0 0.0
        %384 = vmatpush1.msra.mxu0 %v314
        %385 = vmatprep.subr.mxu0 0.0
        %386 = vmatpush2.msra.mxu0 0.0
        %387 = vmatprep.subr.mxu0 0.0
        %388 = vmatpush2.msra.mxu0 0.0
        %389 = vmatprep.subr.mxu0 0.0
        %390 = vmatpush2.msra.mxu0 0.0
        %391 = vmatprep.subr.mxu0 0.0
        %392 = vmatpush2.msra.mxu0 0.0
        %393 = vmatprep.subr.mxu0 0.0
        %394 = vmatpush2.msra.mxu0 0.0
        %395 = vmatprep.subr.mxu0 0.0
        %396 = vmatpush2.msra.mxu0 0.0
        %397 = vmatprep.subr.mxu0 0.0
        %398 = vmatpush2.msra.mxu0 0.0
        %399 = vmatprep.subr.mxu0 0.0
        %400 = vmatpush2.msra.mxu0 0.0
        %401 = vmatprep.subr.mxu0 0.0
        %402 = vmatpush2.msra.mxu0 0.0
        %403 = vmatprep.subr.mxu0 0.0
        %404 = vmatpush2.msra.mxu0 0.0
        %405 = vmatprep.subr.mxu0 0.0
        %406 = vmatpush2.msra.mxu0 0.0
        %407 = vmatprep.subr.mxu0 0.0
        %408 = vmatpush2.msra.mxu0 0.0
        %409 = vmatprep.subr.mxu0 0.0
        %410 = vmatpush2.msra.mxu0 0.0
        %411 = vmatprep.subr.mxu0 0.0
        %412 = vmatpush2.msra.mxu0 0.0
        %413 = vmatprep.subr.mxu0 0.0
        %414 = vmatpush2.msra.mxu0 0.0
        %415 = vmatprep.subr.mxu0 0.0
        %416 = vmatpush2.msra.mxu0 0.0
        %417 = vmatprep.mubr.f32.mxu0 0.0
        %418 = vmatmul.mubr.f32.gmra.mxu0 %v342
        %v419 = vpop.f32.mrf.mxu0
        %v420 = vadd.f32 %v323, %v419
        %v421 = vpop.f32.mrf.mxu0
        %422 = vmatprep.mubr.f32.mxu0 0.0
        %423 = vmatmul.mubr.f32.gmra.mxu0 %v345
        %v424 = vpop.f32.mrf.mxu0
        %v425 = vadd.f32 %v328, %v424
        %v426 = vpop.f32.mrf.mxu0
        %427 = vmatprep.mubr.f32.mxu0 0.0
        %428 = vmatmul.mubr.f32.gmra.mxu0 %v348
        %v429 = vpop.f32.mrf.mxu0
        %v430 = vadd.f32 %v333, %v429
        %v431 = vpop.f32.mrf.mxu0
        %432 = vmatprep.mubr.f32.mxu0 0.0
        %433 = vmatmul.mubr.f32.gmra.mxu0 %v351
        %v434 = vpop.f32.mrf.mxu0
        %v435 = vadd.f32 %v338, %v434
        %v436 = vpop.f32.mrf.mxu0
        %437 = vdwg.mxu0
        %s438 = sld [smem:[#allocation3]]
        %vm439 = vcmp.ge.f32.partialorder %v420, 0.0
        %vm440 = vcmp.ge.f32.partialorder %v425, 0.0
        %vm441 = vcmp.ge.f32.partialorder %v430, 0.0
        %vm442 = vcmp.ge.f32.partialorder %v435, 0.0
        %v443 = vstv %s438
        %v444 = vmul.f32 %v443, %v420
        %v445 = vmul.f32 %v443, %v425
        %v446 = vmul.f32 %v443, %v430
        %v447 = vmul.f32 %v443, %v435
        %v448 = vsel %vm439, %v420, %v444
        %v449 = vsel %vm440, %v425, %v445
        %v450 = vsel %vm441, %v430, %v446
        %v451 = vsel %vm442, %v435, %v447
        %v452 = vadd.f32 %v448, %v449
        %v453 = vadd.f32 %v452, %v450
        %v454 = vadd.f32 %v453, %v451
        %455 = vadd.xlane.f32.xlu0 %v454
        %v456 = vpop.xlane.xlu0 %455
        %v457 = vrot.slane %v456, 4
        %v458 = vadd.f32 %v456, %v457
        %v459 = vrot.slane %v458, 2
        %v460 = vadd.f32 %v458, %v459
        %v461 = vrot.slane %v460, 1
        %v462 = vadd.f32 %v460, %v461
        %s463 = vtos %v462
        %v464 = vmul.f32 %v448, %v448
        %v465 = vmul.f32 %v449, %v449
        %v466 = vmul.f32 %v450, %v450
        %v467 = vmul.f32 %v451, %v451
        %v468 = vadd.f32 %v464, %v465
        %v469 = vadd.f32 %v468, %v466
        %v470 = vadd.f32 %v469, %v467
        %471 = vadd.xlane.f32.xlu0 %v470
        %v472 = vpop.xlane.xlu0 %471
        %v473 = vrot.slane %v472, 4
        %v474 = vadd.f32 %v472, %v473
        %v475 = vrot.slane %v474, 2
        %v476 = vadd.f32 %v474, %v475
        %v477 = vrot.slane %v476, 1
        %v478 = vadd.f32 %v476, %v477
        %s479 = vtos %v478
        %v480 = vstv %s463
        %v481 = vstv %s479
        %vm482 = vcmask 1040384
        %v483 = vsel %vm482, %v480, %v481
        %v484 = vld [vmem:[%s304] sm:$0x3]
        %v485 = vadd.f32 %v484, %v483
        %486 = vst [vmem:[%s304] sm:$0x3] %v485
        %487 = vst [vmem:[%s297] sm:$0xff] %v448
        %488 = vst [vmem:[%s297 + $0x8] sm:$0xff] %v449
        %489 = vst [vmem:[%s297 + $0x10] sm:$0xff] %v450
        %490 = vst [vmem:[%s297 + $0x18] sm:$0xff] %v451
        %s491 = sand.u32 %s137, 1
        %s492 = scalar_lea.sflag [#allocation4], %s491
        %s493 = sand.u32 %s137, 1
        %s494 = smul.addr %s493, 32
        %s495 = scalar_lea.vmem [#allocation6], %s494
        %s496 = sand.u32 %s163, 1
        %s497 = scalar_lea.sflag [#allocation8], %s496
        %s498 = sand.u32 %s163, 1
        %s499 = smul.addr %s498, 2
        %s500 = scalar_lea.vmem [#allocation7], %s499
        // Predicated region
        $region83: #{tpu_custom_call.1} parent=69 // pred_check
          %p501 = pneg %p147
        $region84: #{tpu_custom_call.1} parent=69 // pred_check_branch
          %503 = sbr.rel (%p501) target = $region86
        $region85: #{tpu_custom_call.1} parent=69 // pred_region
          %s505 = ssub.s32 512, 512
          %506 = vsyncadd %s492, %s505
          %s507 = smul.addr %s28, 8
          %s508 = sadd.s32 %s29, %s507
          %s509 = smul.addr %s508, 128
          %s510 = scalar_lea.hbm %s4, %s509
          %s511 = sshll.u32 %s495, 4
          %s512 = int_to_ptr.vmem [resolvable:$true] %s511
          %517 = dma.vmem_to_hbm [thread:$0]  %s512, 512, %s510, %s492, 128, 256, 8
        $region86: #{tpu_custom_call.1} parent=69 // pred_fallthru
          _
        // Predicated region
        $region87: #{tpu_custom_call.1} parent=69 // pred_check
          %p518 = pneg %p173
        $region88: #{tpu_custom_call.1} parent=69 // pred_check_branch
          %520 = sbr.rel (%p518) target = $region90
        $region89: #{tpu_custom_call.1} parent=69 // pred_region
          %s522 = ssub.s32 32, 32
          %523 = vsyncadd %s497, %s522
          %s524 = smul.addr %s28, 32
          %s525 = scalar_lea.hbm %s5, %s524
          %s527 = sshll.u32 %s500, 4
          %s528 = int_to_ptr.vmem [resolvable:$true] %s527
          %530 = dma.vmem_to_hbm [thread:$0]  %s528, 32, %s525, %s497
        $region90: #{tpu_custom_call.1} parent=69 // pred_fallthru
          _
      $region70: #{tpu_custom_call.1} parent=5 // pred_fallthru
        _
      %p531 = scmp.le.s32.totalorder 2, %s19
      // Predicated region
      $region91: #{tpu_custom_call.1} parent=5 // pred_check
        %p532 = pneg %p531
      $region92: #{tpu_custom_call.1} parent=5 // pred_check_branch
        %534 = sbr.rel (%p532) target = $region94
      $region93: #{tpu_custom_call.1} parent=5 // pred_region
        %s535 = ssub.s32 %s19, 2
        // Predicated region
        $region95: #{tpu_custom_call.1} parent=93 // pred_check
          %p536 = pneg %p153
        $region96: #{tpu_custom_call.1} parent=93 // pred_check_branch
          %538 = sbr.rel (%p536) target = $region98
        $region97: #{tpu_custom_call.1} parent=93 // pred_region
          %s539 = sand.u32 %s138, 1
          %s540 = scalar_lea.sflag [#allocation4], %s539
          %s541 = sand.u32 %s138, 1
          %s542 = smul.addr %s541, 32
          %s543 = scalar_lea.vmem [#allocation6], %s542
          %544 = dma.done %s540, 512
        $region98: #{tpu_custom_call.1} parent=93 // pred_fallthru
          _
        // Predicated region
        $region99: #{tpu_custom_call.1} parent=93 // pred_check
          %p545 = pneg %p179
        $region100: #{tpu_custom_call.1} parent=93 // pred_check_branch
          %547 = sbr.rel (%p545) target = $region102
        $region101: #{tpu_custom_call.1} parent=93 // pred_region
          %s548 = sand.u32 %s164, 1
          %s549 = scalar_lea.sflag [#allocation8], %s548
          %s550 = sand.u32 %s164, 1
          %s551 = smul.addr %s550, 2
          %s552 = scalar_lea.vmem [#allocation7], %s551
          %553 = dma.done %s549, 32
        $region102: #{tpu_custom_call.1} parent=93 // pred_fallthru
          _
      $region94: #{tpu_custom_call.1} parent=5 // pred_fallthru
        _
    $region6: #{tpu_custom_call.1} parent=1 // loop_footer
      %s23 = sadd.s32 1, %s19
    $region7: #{tpu_custom_call.1} parent=1 // loop_footer_branch
      %18 = sbr.rel target = $region3
    $region8: #{tpu_custom_call.1} parent=1 // loop_exit
      _
    %554 = vsyncpa [#allocation4], 1
    %s555 = scalar_lea.sflag [#allocation4], 1
    %556 = vsyncpa %s555, 1
    %557 = vsyncpa [#allocation8], 1
    %s558 = scalar_lea.sflag [#allocation8], 1
    %559 = vsyncpa %s558, 1
    %560 = vsyncpa [#allocation5], 1
    %s561 = scalar_lea.sflag [#allocation5], 1
    %562 = vsyncpa %s561, 1

</llo_original>
